<compile_context>
chip_gen: v6e
topology: v6e:2x2x1
jax: 0.10.0
libtpu: 0.0.40
codegen_flags: <defaults>
</compile_context>

<pallas_src>
import jax
import jax.numpy as jnp
from jax.experimental import pallas as pl
from jax.experimental.pallas import tpu as pltpu


# ----------------------------------------------------------------------------
# Kernel: full LSTM recurrence + FC head in one invocation (everything in VMEM)
# ----------------------------------------------------------------------------
def lstm_fc_kernel(x_ref, wih_ref, whh_ref, b_ref, wfc_ref, bfc_ref,
                   pred_ref, hn_ref, cn_ref):
    Bp, H = hn_ref.shape              # padded batch (sublane-aligned), hidden size
    TB, I = x_ref.shape               # T*Bp, input size
    T = TB // Bp
    G = 4 * H                         # packed gate width (lane-aligned)
    O = pred_ref.shape[1]

    wih = wih_ref[...]                # (I, 4H)   i/f/o columns pre-scaled by 0.5
    whh = whh_ref[...]                # (H, 4H)   i/f/o columns pre-scaled by 0.5
    b = b_ref[...]                    # (1, 4H)   i/f/o entries pre-scaled by 0.5

    # Constant per-lane affine fix-up turning the single full-width tanh into
    # sigmoid on the i/f/o blocks:  sigmoid(z) = 0.5 + 0.5 * tanh(z/2).
    lane = jax.lax.broadcasted_iota(jnp.int32, (1, G), 1)
    is_g_block = (lane >= 2 * H) & (lane < 3 * H)
    act_scale = jnp.where(is_g_block, 1.0, 0.5).astype(jnp.float32)
    act_offset = jnp.where(is_g_block, 0.0, 0.5).astype(jnp.float32)

    h = jnp.zeros((Bp, H), jnp.float32)
    c = jnp.zeros((Bp, H), jnp.float32)

    # ---- fully unrolled recurrence (T is small & static) ----
    # TODO(synk): whh could be held weight-stationary in the MXU via
    # pltpu.matmul_push_rhs / matmul_acc_lhs / matmul_pop (and on v7x the MRB
    # could fold the `+ g_in` add into the result path); skipped to keep the
    # lowering portable across v5e/v6e/v7x.
    for t in range(T):
        x_t = x_ref[t * Bp:(t + 1) * Bp, :]                # (Bp, I) static view
        if I == 1:
            # Pure VPU broadcast outer product -- off the serial MXU chain.
            g_in = x_t * wih + b                           # (Bp, 4H)
        else:
            g_in = jnp.dot(x_t, wih,
                           preferred_element_type=jnp.float32) + b
        gates = g_in + jnp.dot(h, whh, preferred_element_type=jnp.float32)
        act = jnp.tanh(gates) * act_scale + act_offset     # one EUP pass + VPU fixup
        i_g = act[:, 0 * H:1 * H]
        f_g = act[:, 1 * H:2 * H]
        g_g = act[:, 2 * H:3 * H]
        o_g = act[:, 3 * H:4 * H]
        c = f_g * c + i_g * g_g
        h = o_g * jnp.tanh(c)

    # FC head on the last hidden state (== lstm_out[:, -1, :] for a 1-layer LSTM).
    if O == 1:
        # VPU multiply + lane reduction; avoids an extra MXU fill/drain at the tail.
        pred = jnp.sum(h * wfc_ref[...], axis=-1, keepdims=True) + bfc_ref[...]
    else:
        pred = jnp.dot(h, wfc_ref[...],
                       preferred_element_type=jnp.float32) + bfc_ref[...]
    pred_ref[...] = pred
    hn_ref[...] = h
    cn_ref[...] = c


# ----------------------------------------------------------------------------
# Wrapper: repack to TPU-friendly layouts, call the kernel, slice back
# ----------------------------------------------------------------------------
def _round_up(n, m):
    return ((n + m - 1) // m) * m


def _prescale_ifo(w, H):
    """w: (rows, 4H) packed (i,f,g,o).  Scale the i/f/o gate columns by 0.5 so
    the kernel can use sigmoid(z) = 0.5 + 0.5*tanh(z/2) with one full-width tanh."""
    col_scale = jnp.concatenate([
        jnp.full((H,), 0.5, w.dtype), jnp.full((H,), 0.5, w.dtype),
        jnp.ones((H,), w.dtype), jnp.full((H,), 0.5, w.dtype)])
    return w * col_scale[None, :]


@jax.jit
def autoregressive_rnn_forward(x, params):
    """x: (B, T, I) float32.  Returns (pred (B, O), (h_n, c_n) each (1, B, H))."""
    B, T, I = x.shape
    w_ih, w_hh = params["w_ih"], params["w_hh"]       # (4H, I), (4H, H)
    b_ih, b_hh = params["b_ih"], params["b_hh"]       # (4H,), (4H,)
    w_fc, b_fc = params["w_fc"], params["b_fc"]       # (O, H), (O,)
    H = w_hh.shape[1]
    O = w_fc.shape[0]
    assert (4 * H) % 128 == 0, "packed gate width must be lane-aligned"

    SUBLANE = 8
    Bp = _round_up(B, SUBLANE)        # sublane-aligned batch
    # TODO(synk): for throughput on v7x, grow Bp toward 128-256 and add a
    # batch-tile grid axis with dimension_semantics=("parallel",) so both
    # TensorCores are used; kept grid-less here because the example batch is
    # tiny and the kernel is latency-bound on the serial recurrence.

    f32 = jnp.float32
    # Compact (no zero-padded rows/columns) weight slabs, pre-scaled for the
    # sigmoid-via-tanh trick.
    wih_p = _prescale_ifo(w_ih.T.astype(f32), H)                  # (I, 4H)
    whh_p = _prescale_ifo(w_hh.T.astype(f32), H)                  # (H, 4H)
    b_p = _prescale_ifo((b_ih + b_hh)[None, :].astype(f32), H)    # (1, 4H)
    if O == 1:
        wfc_p = w_fc.astype(f32)                                  # (1, H) row for VPU reduce
        bfc_p = b_fc.astype(f32).reshape(1, 1)                    # (1, 1)
    else:
        wfc_p = w_fc.T.astype(f32)                                # (H, O)
        bfc_p = b_fc.astype(f32)[None, :]                         # (1, O)

    # Time-major, batch padded to the sublane height, flattened to (T*Bp, I) so
    # per-step slices inside the kernel are static, sublane-aligned views.
    x_tb = jnp.transpose(x.astype(f32), (1, 0, 2))                # (T, B, I)
    x_p = jnp.zeros((T, Bp, I), f32).at[:, :B, :].set(x_tb).reshape(T * Bp, I)

    vmem = pl.BlockSpec(memory_space=pltpu.MemorySpace.VMEM)
    pred_p, hn_p, cn_p = pl.pallas_call(
        lstm_fc_kernel,
        out_shape=(
            jax.ShapeDtypeStruct((Bp, O), f32),
            jax.ShapeDtypeStruct((Bp, H), f32),
            jax.ShapeDtypeStruct((Bp, H), f32),
        ),
        in_specs=[vmem] * 6,
        out_specs=(vmem, vmem, vmem),
    )(x_p, wih_p, whh_p, b_p, wfc_p, bfc_p)

    pred = pred_p[:B, :]
    h_n = hn_p[:B, :][None]
    c_n = cn_p[:B, :][None]
    return pred, (h_n, c_n)
    # TODO(synk): if this forward is driven by a host-side autoregressive loop,
    # fold that loop into the kernel (grid axis over decode steps, h/c carried
    # via input_output_aliases) so whh/wfc stay VMEM-resident across steps.


# ----------------------------------------------------------------------------
# Pure-JAX reference (mirrors torch.nn.LSTM + nn.Linear semantics, unpadded)
# ----------------------------------------------------------------------------
def reference_forward(x, params):
    B, T, I = x.shape
    H = params["w_hh"].shape[1]
    wih_t = params["w_ih"].T
    whh_t = params["w_hh"].T
    b = params["b_ih"] + params["b_hh"]
    h = jnp.zeros((B, H), jnp.float32)
    c = jnp.zeros((B, H), jnp.float32)
    for t in range(T):
        gates = x[:, t, :] @ wih_t + h @ whh_t + b
        i_g = jax.nn.sigmoid(gates[:, 0 * H:1 * H])
        f_g = jax.nn.sigmoid(gates[:, 1 * H:2 * H])
        g_g = jnp.tanh(gates[:, 2 * H:3 * H])
        o_g = jax.nn.sigmoid(gates[:, 3 * H:4 * H])
        c = f_g * c + i_g * g_g
        h = o_g * jnp.tanh(c)
    pred = h @ params["w_fc"].T + params["b_fc"]
    return pred, (h[None], c[None])


# ----------------------------------------------------------------------------
# Deterministic parameter init (same shapes as nn.LSTM / nn.Linear in torch)
# ----------------------------------------------------------------------------
def init_params(key, input_size=1, hidden_size=64, output_size=1):
    k = 1.0 / jnp.sqrt(hidden_size)
    ks = jax.random.split(key, 6)
    return {
        "w_ih": jax.random.uniform(ks[0], (4 * hidden_size, input_size), jnp.float32, -k, k),
        "w_hh": jax.random.uniform(ks[1], (4 * hidden_size, hidden_size), jnp.float32, -k, k),
        "b_ih": jax.random.uniform(ks[2], (4 * hidden_size,), jnp.float32, -k, k),
        "b_hh": jax.random.uniform(ks[3], (4 * hidden_size,), jnp.float32, -k, k),
        "w_fc": jax.random.uniform(ks[4], (output_size, hidden_size), jnp.float32, -k, k),
        "b_fc": jax.random.uniform(ks[5], (output_size,), jnp.float32, -k, k),
    }


if __name__ == "__main__":
    B, T, I, H, O = 2, 8, 1, 64, 1
    key = jax.random.PRNGKey(0)
    k_x, k_p = jax.random.split(key)
    x = jax.random.normal(k_x, (B, T, I), jnp.float32)
    params = init_params(k_p, input_size=I, hidden_size=H, output_size=O)

    pred, (h_n, c_n) = autoregressive_rnn_forward(x, params)
    jax.block_until_ready((pred, h_n, c_n))

    ref_pred, (ref_h, ref_c) = reference_forward(x, params)
    assert pred.shape == (B, O) and h_n.shape == (1, B, H) and c_n.shape == (1, B, H)
    assert jnp.allclose(pred, ref_pred, atol=1e-5, rtol=1e-5)
    assert jnp.allclose(h_n, ref_h, atol=1e-5, rtol=1e-5)
    assert jnp.allclose(c_n, ref_c, atol=1e-5, rtol=1e-5)

    print("KERNEL_OK")
</pallas_src>

<mosaic_0001>
module attributes {stable_mosaic.version = 11 : i64} {
  func.func @lstm_fc_kernel(%arg0: memref<64x1xf32, #tpu.memory_space<vmem>>, %arg1: memref<1x256xf32, #tpu.memory_space<vmem>>, %arg2: memref<64x256xf32, #tpu.memory_space<vmem>>, %arg3: memref<1x256xf32, #tpu.memory_space<vmem>>, %arg4: memref<1x64xf32, #tpu.memory_space<vmem>>, %arg5: memref<1x1xf32, #tpu.memory_space<vmem>>, %arg6: memref<8x1xf32, #tpu.memory_space<vmem>>, %arg7: memref<8x64xf32, #tpu.memory_space<vmem>>, %arg8: memref<8x64xf32, #tpu.memory_space<vmem>>) attributes {dimension_semantics = [], scalar_prefetch = 0 : i64, scratch_operands = 0 : i64, tpu.core_type = #tpu.core_type<tc>} {
    %c0 = arith.constant 0 : index
    %c0_0 = arith.constant 0 : index
    %0 = vector.load %arg1[%c0, %c0_0] : memref<1x256xf32, #tpu.memory_space<vmem>>, vector<1x256xf32>
    %c0_1 = arith.constant 0 : index
    %c0_2 = arith.constant 0 : index
    %1 = vector.load %arg2[%c0_1, %c0_2] : memref<64x256xf32, #tpu.memory_space<vmem>>, vector<64x256xf32>
    %c0_3 = arith.constant 0 : index
    %c0_4 = arith.constant 0 : index
    %2 = vector.load %arg3[%c0_3, %c0_4] : memref<1x256xf32, #tpu.memory_space<vmem>>, vector<1x256xf32>
    %3 = tpu.iota {dimensions = array<i32: 1>} : vector<1x256xi32>
    %c128_i32 = arith.constant 128 : i32
    %4 = vector.broadcast %c128_i32 : i32 to vector<1x256xi32>
    %5 = arith.cmpi sge, %3, %4 : vector<1x256xi32>
    %c192_i32 = arith.constant 192 : i32
    %6 = vector.broadcast %c192_i32 : i32 to vector<1x256xi32>
    %7 = arith.cmpi slt, %3, %6 : vector<1x256xi32>
    %8 = arith.andi %5, %7 : vector<1x256xi1>
    %cst = arith.constant 1.000000e+00 : f32
    %cst_5 = arith.constant 5.000000e-01 : f32
    %9 = vector.broadcast %cst : f32 to vector<1x256xf32>
    %10 = vector.broadcast %cst_5 : f32 to vector<1x256xf32>
    %11 = arith.select %8, %9, %10 : vector<1x256xi1>, vector<1x256xf32>
    %cst_6 = arith.constant 0.000000e+00 : f32
    %cst_7 = arith.constant 5.000000e-01 : f32
    %12 = vector.broadcast %cst_6 : f32 to vector<1x256xf32>
    %13 = vector.broadcast %cst_7 : f32 to vector<1x256xf32>
    %14 = arith.select %8, %12, %13 : vector<1x256xi1>, vector<1x256xf32>
    %cst_8 = arith.constant 0.000000e+00 : f32
    %15 = vector.broadcast %cst_8 : f32 to vector<8x64xf32>
    %cst_9 = arith.constant 0.000000e+00 : f32
    %16 = vector.broadcast %cst_9 : f32 to vector<8x64xf32>
    %c0_10 = arith.constant 0 : index
    %c0_11 = arith.constant 0 : index
    %17 = vector.load %arg0[%c0_10, %c0_11] : memref<64x1xf32, #tpu.memory_space<vmem>>, vector<8x1xf32>
    %18 = vector.broadcast %17 : vector<8x1xf32> to vector<8x256xf32>
    %19 = vector.broadcast %0 : vector<1x256xf32> to vector<8x256xf32>
    %20 = arith.mulf %18, %19 : vector<8x256xf32>
    %21 = vector.broadcast %2 : vector<1x256xf32> to vector<8x256xf32>
    %22 = arith.addf %20, %21 : vector<8x256xf32>
    %cst_12 = arith.constant dense<0.000000e+00> : vector<8x256xf32>
    %23 = tpu.matmul %15, %1, %cst_12 {dimension_numbers = #tpu.dot_dimension_numbers<[1], [0], [0], [1], [0, 0, 1, 1], [], []>} : vector<8x64xf32>, vector<64x256xf32>, vector<8x256xf32> -> vector<8x256xf32>
    %24 = arith.addf %22, %23 : vector<8x256xf32>
    %25 = math.tanh %24 : vector<8x256xf32>
    %26 = vector.broadcast %11 : vector<1x256xf32> to vector<8x256xf32>
    %27 = arith.mulf %25, %26 : vector<8x256xf32>
    %28 = vector.broadcast %14 : vector<1x256xf32> to vector<8x256xf32>
    %29 = arith.addf %27, %28 : vector<8x256xf32>
    %30 = vector.extract_strided_slice %29 {offsets = [0, 0], sizes = [8, 64], strides = [1, 1]} : vector<8x256xf32> to vector<8x64xf32>
    %31 = vector.extract_strided_slice %29 {offsets = [0, 64], sizes = [8, 64], strides = [1, 1]} : vector<8x256xf32> to vector<8x64xf32>
    %32 = vector.extract_strided_slice %29 {offsets = [0, 128], sizes = [8, 64], strides = [1, 1]} : vector<8x256xf32> to vector<8x64xf32>
    %33 = vector.extract_strided_slice %29 {offsets = [0, 192], sizes = [8, 64], strides = [1, 1]} : vector<8x256xf32> to vector<8x64xf32>
    %34 = arith.mulf %31, %16 : vector<8x64xf32>
    %35 = arith.mulf %30, %32 : vector<8x64xf32>
    %36 = arith.addf %34, %35 : vector<8x64xf32>
    %37 = math.tanh %36 : vector<8x64xf32>
    %38 = arith.mulf %33, %37 : vector<8x64xf32>
    %c8 = arith.constant 8 : index
    %c0_13 = arith.constant 0 : index
    %39 = vector.load %arg0[%c8, %c0_13] : memref<64x1xf32, #tpu.memory_space<vmem>>, vector<8x1xf32>
    %40 = vector.broadcast %39 : vector<8x1xf32> to vector<8x256xf32>
    %41 = vector.broadcast %0 : vector<1x256xf32> to vector<8x256xf32>
    %42 = arith.mulf %40, %41 : vector<8x256xf32>
    %43 = vector.broadcast %2 : vector<1x256xf32> to vector<8x256xf32>
    %44 = arith.addf %42, %43 : vector<8x256xf32>
    %cst_14 = arith.constant dense<0.000000e+00> : vector<8x256xf32>
    %45 = tpu.matmul %38, %1, %cst_14 {dimension_numbers = #tpu.dot_dimension_numbers<[1], [0], [0], [1], [0, 0, 1, 1], [], []>} : vector<8x64xf32>, vector<64x256xf32>, vector<8x256xf32> -> vector<8x256xf32>
    %46 = arith.addf %44, %45 : vector<8x256xf32>
    %47 = math.tanh %46 : vector<8x256xf32>
    %48 = vector.broadcast %11 : vector<1x256xf32> to vector<8x256xf32>
    %49 = arith.mulf %47, %48 : vector<8x256xf32>
    %50 = vector.broadcast %14 : vector<1x256xf32> to vector<8x256xf32>
    %51 = arith.addf %49, %50 : vector<8x256xf32>
    %52 = vector.extract_strided_slice %51 {offsets = [0, 0], sizes = [8, 64], strides = [1, 1]} : vector<8x256xf32> to vector<8x64xf32>
    %53 = vector.extract_strided_slice %51 {offsets = [0, 64], sizes = [8, 64], strides = [1, 1]} : vector<8x256xf32> to vector<8x64xf32>
    %54 = vector.extract_strided_slice %51 {offsets = [0, 128], sizes = [8, 64], strides = [1, 1]} : vector<8x256xf32> to vector<8x64xf32>
    %55 = vector.extract_strided_slice %51 {offsets = [0, 192], sizes = [8, 64], strides = [1, 1]} : vector<8x256xf32> to vector<8x64xf32>
    %56 = arith.mulf %53, %36 : vector<8x64xf32>
    %57 = arith.mulf %52, %54 : vector<8x64xf32>
    %58 = arith.addf %56, %57 : vector<8x64xf32>
    %59 = math.tanh %58 : vector<8x64xf32>
    %60 = arith.mulf %55, %59 : vector<8x64xf32>
    %c16 = arith.constant 16 : index
    %c0_15 = arith.constant 0 : index
    %61 = vector.load %arg0[%c16, %c0_15] : memref<64x1xf32, #tpu.memory_space<vmem>>, vector<8x1xf32>
    %62 = vector.broadcast %61 : vector<8x1xf32> to vector<8x256xf32>
    %63 = vector.broadcast %0 : vector<1x256xf32> to vector<8x256xf32>
    %64 = arith.mulf %62, %63 : vector<8x256xf32>
    %65 = vector.broadcast %2 : vector<1x256xf32> to vector<8x256xf32>
    %66 = arith.addf %64, %65 : vector<8x256xf32>
    %cst_16 = arith.constant dense<0.000000e+00> : vector<8x256xf32>
    %67 = tpu.matmul %60, %1, %cst_16 {dimension_numbers = #tpu.dot_dimension_numbers<[1], [0], [0], [1], [0, 0, 1, 1], [], []>} : vector<8x64xf32>, vector<64x256xf32>, vector<8x256xf32> -> vector<8x256xf32>
    %68 = arith.addf %66, %67 : vector<8x256xf32>
    %69 = math.tanh %68 : vector<8x256xf32>
    %70 = vector.broadcast %11 : vector<1x256xf32> to vector<8x256xf32>
    %71 = arith.mulf %69, %70 : vector<8x256xf32>
    %72 = vector.broadcast %14 : vector<1x256xf32> to vector<8x256xf32>
    %73 = arith.addf %71, %72 : vector<8x256xf32>
    %74 = vector.extract_strided_slice %73 {offsets = [0, 0], sizes = [8, 64], strides = [1, 1]} : vector<8x256xf32> to vector<8x64xf32>
    %75 = vector.extract_strided_slice %73 {offsets = [0, 64], sizes = [8, 64], strides = [1, 1]} : vector<8x256xf32> to vector<8x64xf32>
    %76 = vector.extract_strided_slice %73 {offsets = [0, 128], sizes = [8, 64], strides = [1, 1]} : vector<8x256xf32> to vector<8x64xf32>
    %77 = vector.extract_strided_slice %73 {offsets = [0, 192], sizes = [8, 64], strides = [1, 1]} : vector<8x256xf32> to vector<8x64xf32>
    %78 = arith.mulf %75, %58 : vector<8x64xf32>
    %79 = arith.mulf %74, %76 : vector<8x64xf32>
    %80 = arith.addf %78, %79 : vector<8x64xf32>
    %81 = math.tanh %80 : vector<8x64xf32>
    %82 = arith.mulf %77, %81 : vector<8x64xf32>
    %c24 = arith.constant 24 : index
    %c0_17 = arith.constant 0 : index
    %83 = vector.load %arg0[%c24, %c0_17] : memref<64x1xf32, #tpu.memory_space<vmem>>, vector<8x1xf32>
    %84 = vector.broadcast %83 : vector<8x1xf32> to vector<8x256xf32>
    %85 = vector.broadcast %0 : vector<1x256xf32> to vector<8x256xf32>
    %86 = arith.mulf %84, %85 : vector<8x256xf32>
    %87 = vector.broadcast %2 : vector<1x256xf32> to vector<8x256xf32>
    %88 = arith.addf %86, %87 : vector<8x256xf32>
    %cst_18 = arith.constant dense<0.000000e+00> : vector<8x256xf32>
    %89 = tpu.matmul %82, %1, %cst_18 {dimension_numbers = #tpu.dot_dimension_numbers<[1], [0], [0], [1], [0, 0, 1, 1], [], []>} : vector<8x64xf32>, vector<64x256xf32>, vector<8x256xf32> -> vector<8x256xf32>
    %90 = arith.addf %88, %89 : vector<8x256xf32>
    %91 = math.tanh %90 : vector<8x256xf32>
    %92 = vector.broadcast %11 : vector<1x256xf32> to vector<8x256xf32>
    %93 = arith.mulf %91, %92 : vector<8x256xf32>
    %94 = vector.broadcast %14 : vector<1x256xf32> to vector<8x256xf32>
    %95 = arith.addf %93, %94 : vector<8x256xf32>
    %96 = vector.extract_strided_slice %95 {offsets = [0, 0], sizes = [8, 64], strides = [1, 1]} : vector<8x256xf32> to vector<8x64xf32>
    %97 = vector.extract_strided_slice %95 {offsets = [0, 64], sizes = [8, 64], strides = [1, 1]} : vector<8x256xf32> to vector<8x64xf32>
    %98 = vector.extract_strided_slice %95 {offsets = [0, 128], sizes = [8, 64], strides = [1, 1]} : vector<8x256xf32> to vector<8x64xf32>
    %99 = vector.extract_strided_slice %95 {offsets = [0, 192], sizes = [8, 64], strides = [1, 1]} : vector<8x256xf32> to vector<8x64xf32>
    %100 = arith.mulf %97, %80 : vector<8x64xf32>
    %101 = arith.mulf %96, %98 : vector<8x64xf32>
    %102 = arith.addf %100, %101 : vector<8x64xf32>
    %103 = math.tanh %102 : vector<8x64xf32>
    %104 = arith.mulf %99, %103 : vector<8x64xf32>
    %c32 = arith.constant 32 : index
    %c0_19 = arith.constant 0 : index
    %105 = vector.load %arg0[%c32, %c0_19] : memref<64x1xf32, #tpu.memory_space<vmem>>, vector<8x1xf32>
    %106 = vector.broadcast %105 : vector<8x1xf32> to vector<8x256xf32>
    %107 = vector.broadcast %0 : vector<1x256xf32> to vector<8x256xf32>
    %108 = arith.mulf %106, %107 : vector<8x256xf32>
    %109 = vector.broadcast %2 : vector<1x256xf32> to vector<8x256xf32>
    %110 = arith.addf %108, %109 : vector<8x256xf32>
    %cst_20 = arith.constant dense<0.000000e+00> : vector<8x256xf32>
    %111 = tpu.matmul %104, %1, %cst_20 {dimension_numbers = #tpu.dot_dimension_numbers<[1], [0], [0], [1], [0, 0, 1, 1], [], []>} : vector<8x64xf32>, vector<64x256xf32>, vector<8x256xf32> -> vector<8x256xf32>
    %112 = arith.addf %110, %111 : vector<8x256xf32>
    %113 = math.tanh %112 : vector<8x256xf32>
    %114 = vector.broadcast %11 : vector<1x256xf32> to vector<8x256xf32>
    %115 = arith.mulf %113, %114 : vector<8x256xf32>
    %116 = vector.broadcast %14 : vector<1x256xf32> to vector<8x256xf32>
    %117 = arith.addf %115, %116 : vector<8x256xf32>
    %118 = vector.extract_strided_slice %117 {offsets = [0, 0], sizes = [8, 64], strides = [1, 1]} : vector<8x256xf32> to vector<8x64xf32>
    %119 = vector.extract_strided_slice %117 {offsets = [0, 64], sizes = [8, 64], strides = [1, 1]} : vector<8x256xf32> to vector<8x64xf32>
    %120 = vector.extract_strided_slice %117 {offsets = [0, 128], sizes = [8, 64], strides = [1, 1]} : vector<8x256xf32> to vector<8x64xf32>
    %121 = vector.extract_strided_slice %117 {offsets = [0, 192], sizes = [8, 64], strides = [1, 1]} : vector<8x256xf32> to vector<8x64xf32>
    %122 = arith.mulf %119, %102 : vector<8x64xf32>
    %123 = arith.mulf %118, %120 : vector<8x64xf32>
    %124 = arith.addf %122, %123 : vector<8x64xf32>
    %125 = math.tanh %124 : vector<8x64xf32>
    %126 = arith.mulf %121, %125 : vector<8x64xf32>
    %c40 = arith.constant 40 : index
    %c0_21 = arith.constant 0 : index
    %127 = vector.load %arg0[%c40, %c0_21] : memref<64x1xf32, #tpu.memory_space<vmem>>, vector<8x1xf32>
    %128 = vector.broadcast %127 : vector<8x1xf32> to vector<8x256xf32>
    %129 = vector.broadcast %0 : vector<1x256xf32> to vector<8x256xf32>
    %130 = arith.mulf %128, %129 : vector<8x256xf32>
    %131 = vector.broadcast %2 : vector<1x256xf32> to vector<8x256xf32>
    %132 = arith.addf %130, %131 : vector<8x256xf32>
    %cst_22 = arith.constant dense<0.000000e+00> : vector<8x256xf32>
    %133 = tpu.matmul %126, %1, %cst_22 {dimension_numbers = #tpu.dot_dimension_numbers<[1], [0], [0], [1], [0, 0, 1, 1], [], []>} : vector<8x64xf32>, vector<64x256xf32>, vector<8x256xf32> -> vector<8x256xf32>
    %134 = arith.addf %132, %133 : vector<8x256xf32>
    %135 = math.tanh %134 : vector<8x256xf32>
    %136 = vector.broadcast %11 : vector<1x256xf32> to vector<8x256xf32>
    %137 = arith.mulf %135, %136 : vector<8x256xf32>
    %138 = vector.broadcast %14 : vector<1x256xf32> to vector<8x256xf32>
    %139 = arith.addf %137, %138 : vector<8x256xf32>
    %140 = vector.extract_strided_slice %139 {offsets = [0, 0], sizes = [8, 64], strides = [1, 1]} : vector<8x256xf32> to vector<8x64xf32>
    %141 = vector.extract_strided_slice %139 {offsets = [0, 64], sizes = [8, 64], strides = [1, 1]} : vector<8x256xf32> to vector<8x64xf32>
    %142 = vector.extract_strided_slice %139 {offsets = [0, 128], sizes = [8, 64], strides = [1, 1]} : vector<8x256xf32> to vector<8x64xf32>
    %143 = vector.extract_strided_slice %139 {offsets = [0, 192], sizes = [8, 64], strides = [1, 1]} : vector<8x256xf32> to vector<8x64xf32>
    %144 = arith.mulf %141, %124 : vector<8x64xf32>
    %145 = arith.mulf %140, %142 : vector<8x64xf32>
    %146 = arith.addf %144, %145 : vector<8x64xf32>
    %147 = math.tanh %146 : vector<8x64xf32>
    %148 = arith.mulf %143, %147 : vector<8x64xf32>
    %c48 = arith.constant 48 : index
    %c0_23 = arith.constant 0 : index
    %149 = vector.load %arg0[%c48, %c0_23] : memref<64x1xf32, #tpu.memory_space<vmem>>, vector<8x1xf32>
    %150 = vector.broadcast %149 : vector<8x1xf32> to vector<8x256xf32>
    %151 = vector.broadcast %0 : vector<1x256xf32> to vector<8x256xf32>
    %152 = arith.mulf %150, %151 : vector<8x256xf32>
    %153 = vector.broadcast %2 : vector<1x256xf32> to vector<8x256xf32>
    %154 = arith.addf %152, %153 : vector<8x256xf32>
    %cst_24 = arith.constant dense<0.000000e+00> : vector<8x256xf32>
    %155 = tpu.matmul %148, %1, %cst_24 {dimension_numbers = #tpu.dot_dimension_numbers<[1], [0], [0], [1], [0, 0, 1, 1], [], []>} : vector<8x64xf32>, vector<64x256xf32>, vector<8x256xf32> -> vector<8x256xf32>
    %156 = arith.addf %154, %155 : vector<8x256xf32>
    %157 = math.tanh %156 : vector<8x256xf32>
    %158 = vector.broadcast %11 : vector<1x256xf32> to vector<8x256xf32>
    %159 = arith.mulf %157, %158 : vector<8x256xf32>
    %160 = vector.broadcast %14 : vector<1x256xf32> to vector<8x256xf32>
    %161 = arith.addf %159, %160 : vector<8x256xf32>
    %162 = vector.extract_strided_slice %161 {offsets = [0, 0], sizes = [8, 64], strides = [1, 1]} : vector<8x256xf32> to vector<8x64xf32>
    %163 = vector.extract_strided_slice %161 {offsets = [0, 64], sizes = [8, 64], strides = [1, 1]} : vector<8x256xf32> to vector<8x64xf32>
    %164 = vector.extract_strided_slice %161 {offsets = [0, 128], sizes = [8, 64], strides = [1, 1]} : vector<8x256xf32> to vector<8x64xf32>
    %165 = vector.extract_strided_slice %161 {offsets = [0, 192], sizes = [8, 64], strides = [1, 1]} : vector<8x256xf32> to vector<8x64xf32>
    %166 = arith.mulf %163, %146 : vector<8x64xf32>
    %167 = arith.mulf %162, %164 : vector<8x64xf32>
    %168 = arith.addf %166, %167 : vector<8x64xf32>
    %169 = math.tanh %168 : vector<8x64xf32>
    %170 = arith.mulf %165, %169 : vector<8x64xf32>
    %c56 = arith.constant 56 : index
    %c0_25 = arith.constant 0 : index
    %171 = vector.load %arg0[%c56, %c0_25] : memref<64x1xf32, #tpu.memory_space<vmem>>, vector<8x1xf32>
    %172 = vector.broadcast %171 : vector<8x1xf32> to vector<8x256xf32>
    %173 = vector.broadcast %0 : vector<1x256xf32> to vector<8x256xf32>
    %174 = arith.mulf %172, %173 : vector<8x256xf32>
    %175 = vector.broadcast %2 : vector<1x256xf32> to vector<8x256xf32>
    %176 = arith.addf %174, %175 : vector<8x256xf32>
    %cst_26 = arith.constant dense<0.000000e+00> : vector<8x256xf32>
    %177 = tpu.matmul %170, %1, %cst_26 {dimension_numbers = #tpu.dot_dimension_numbers<[1], [0], [0], [1], [0, 0, 1, 1], [], []>} : vector<8x64xf32>, vector<64x256xf32>, vector<8x256xf32> -> vector<8x256xf32>
    %178 = arith.addf %176, %177 : vector<8x256xf32>
    %179 = math.tanh %178 : vector<8x256xf32>
    %180 = vector.broadcast %11 : vector<1x256xf32> to vector<8x256xf32>
    %181 = arith.mulf %179, %180 : vector<8x256xf32>
    %182 = vector.broadcast %14 : vector<1x256xf32> to vector<8x256xf32>
    %183 = arith.addf %181, %182 : vector<8x256xf32>
    %184 = vector.extract_strided_slice %183 {offsets = [0, 0], sizes = [8, 64], strides = [1, 1]} : vector<8x256xf32> to vector<8x64xf32>
    %185 = vector.extract_strided_slice %183 {offsets = [0, 64], sizes = [8, 64], strides = [1, 1]} : vector<8x256xf32> to vector<8x64xf32>
    %186 = vector.extract_strided_slice %183 {offsets = [0, 128], sizes = [8, 64], strides = [1, 1]} : vector<8x256xf32> to vector<8x64xf32>
    %187 = vector.extract_strided_slice %183 {offsets = [0, 192], sizes = [8, 64], strides = [1, 1]} : vector<8x256xf32> to vector<8x64xf32>
    %188 = arith.mulf %185, %168 : vector<8x64xf32>
    %189 = arith.mulf %184, %186 : vector<8x64xf32>
    %190 = arith.addf %188, %189 : vector<8x64xf32>
    %191 = math.tanh %190 : vector<8x64xf32>
    %192 = arith.mulf %187, %191 : vector<8x64xf32>
    %c0_27 = arith.constant 0 : index
    %c0_28 = arith.constant 0 : index
    %193 = vector.load %arg4[%c0_27, %c0_28] : memref<1x64xf32, #tpu.memory_space<vmem>>, vector<1x64xf32>
    %194 = vector.broadcast %193 : vector<1x64xf32> to vector<8x64xf32>
    %195 = arith.mulf %192, %194 : vector<8x64xf32>
    %cst_29 = arith.constant dense<0.000000e+00> : vector<8xf32>
    %196 = vector.multi_reduction <add>, %195, %cst_29 [1] : vector<8x64xf32> to vector<8xf32>
    %197 = vector.shape_cast %196 : vector<8xf32> to vector<8x1xf32>
    %c0_30 = arith.constant 0 : index
    %c0_31 = arith.constant 0 : index
    %198 = vector.load %arg5[%c0_30, %c0_31] : memref<1x1xf32, #tpu.memory_space<vmem>>, vector<1x1xf32>
    %199 = vector.broadcast %198 : vector<1x1xf32> to vector<8x1xf32>
    %200 = arith.addf %197, %199 : vector<8x1xf32>
    %c0_32 = arith.constant 0 : index
    %c0_33 = arith.constant 0 : index
    %201 = vector.load %arg6[%c0_32, %c0_33] : memref<8x1xf32, #tpu.memory_space<vmem>>, vector<8x1xf32>
    tpu.vector_store %arg6[%c0_32, %c0_33], %200 {strides = array<i32>} : memref<8x1xf32, #tpu.memory_space<vmem>>, vector<8x1xf32>,
    %c0_34 = arith.constant 0 : index
    %c0_35 = arith.constant 0 : index
    %202 = vector.load %arg7[%c0_34, %c0_35] : memref<8x64xf32, #tpu.memory_space<vmem>>, vector<8x64xf32>
    tpu.vector_store %arg7[%c0_34, %c0_35], %192 {strides = array<i32>} : memref<8x64xf32, #tpu.memory_space<vmem>>, vector<8x64xf32>,
    %c0_36 = arith.constant 0 : index
    %c0_37 = arith.constant 0 : index
    %203 = vector.load %arg8[%c0_36, %c0_37] : memref<8x64xf32, #tpu.memory_space<vmem>>, vector<8x64xf32>
    tpu.vector_store %arg8[%c0_36, %c0_37], %190 {strides = array<i32>} : memref<8x64xf32, #tpu.memory_space<vmem>>, vector<8x64xf32>,
    return
  }
}

</mosaic_0001>

<llo_original>
// kernel: autoregressive_rnn_forward.1
$region0: #{autoregressive_rnn_forward.1}
  #allocation0 [shape = 'u32[]', space=smem, size = 0x4, offset = 0x4, fixed_abs, tag = 'smem constant byte address 0x4 - core index']
  #allocation1 [shape = 'u32[144,128]{1,0:T(1,128)}', space=vmem, size = 0x12000, scoped, tag = 'internal scratch']
  #allocation2 [shape = 'f32[1,1]{1,0:T(1,128)S(1)}', space=vmem, size = 0x200, scoped, tag = 'scoped memory for autoregressive_rnn_forward.1']
  %s0 = inlined_call_operand.vmem [shape: f32[64,1], index: 0, kind: input, shape index: {}]
  %s1 = inlined_call_operand.vmem [shape: f32[1,256], index: 1, kind: input, shape index: {}]
  %s2 = inlined_call_operand.vmem [shape: f32[64,256], index: 2, kind: input, shape index: {}]
  %s3 = inlined_call_operand.vmem [shape: f32[1,256], index: 3, kind: input, shape index: {}]
  %s4 = inlined_call_operand.vmem [shape: f32[1,64], index: 4, kind: input, shape index: {}]
  %s5 = inlined_call_operand.<no memory space> [shape: f32[1,1], index: 5, kind: input, shape index: {}]
  %s6 = inlined_call_operand.vmem [shape: f32[8,1], index: 6, kind: output, shape index: {0}]
  %s7 = inlined_call_operand.vmem [shape: f32[8,64], index: 7, kind: output, shape index: {1}]
  %s8 = inlined_call_operand.vmem [shape: f32[8,64], index: 8, kind: output, shape index: {2}]
  %9 = xla_tuple %s6, %s7, %s8
  %s10 = sld [smem:[#allocation0]]
  $region50: #{autoregressive_rnn_forward.1} parent=0
    _
  %s12 = ssub.s32 1, %s10
  %s13 = scalar_select 0, %s12, %s10
  %v14 = vstv %s5
  %15 = vst [vmem:[#allocation2] sm:$0x1] %v14
  // Predicated region
  $region2: #{autoregressive_rnn_forward.1} parent=0 // pred_check
    _
  $region3: #{autoregressive_rnn_forward.1} parent=0 // pred_check_branch
    %17 = sbr.rel (0) target = $region5
  $region4: #{autoregressive_rnn_forward.1} parent=0 // pred_region
    _
  $region5: #{autoregressive_rnn_forward.1} parent=0 // pred_fallthru
    _
  // Predicated region
  $region6: #{autoregressive_rnn_forward.1} parent=0 // pred_check
    _
  $region7: #{autoregressive_rnn_forward.1} parent=0 // pred_check_branch
    %19 = sbr.rel (0) target = $region9
  $region8: #{autoregressive_rnn_forward.1} parent=0 // pred_region
    _
  $region9: #{autoregressive_rnn_forward.1} parent=0 // pred_fallthru
    _
  // Predicated region
  $region10: #{autoregressive_rnn_forward.1} parent=0 // pred_check
    _
  $region11: #{autoregressive_rnn_forward.1} parent=0 // pred_check_branch
    %21 = sbr.rel (0) target = $region13
  $region12: #{autoregressive_rnn_forward.1} parent=0 // pred_region
    _
  $region13: #{autoregressive_rnn_forward.1} parent=0 // pred_fallthru
    _
  // Predicated region
  $region14: #{autoregressive_rnn_forward.1} parent=0 // pred_check
    _
  $region15: #{autoregressive_rnn_forward.1} parent=0 // pred_check_branch
    %23 = sbr.rel (0) target = $region17
  $region16: #{autoregressive_rnn_forward.1} parent=0 // pred_region
    _
  $region17: #{autoregressive_rnn_forward.1} parent=0 // pred_fallthru
    _
  // Predicated region
  $region18: #{autoregressive_rnn_forward.1} parent=0 // pred_check
    _
  $region19: #{autoregressive_rnn_forward.1} parent=0 // pred_check_branch
    %25 = sbr.rel (0) target = $region21
  $region20: #{autoregressive_rnn_forward.1} parent=0 // pred_region
    _
  $region21: #{autoregressive_rnn_forward.1} parent=0 // pred_fallthru
    _
  // Predicated region
  $region22: #{autoregressive_rnn_forward.1} parent=0 // pred_check
    _
  $region23: #{autoregressive_rnn_forward.1} parent=0 // pred_check_branch
    %27 = sbr.rel (0) target = $region25
  $region24: #{autoregressive_rnn_forward.1} parent=0 // pred_region
    _
  $region25: #{autoregressive_rnn_forward.1} parent=0 // pred_fallthru
    _
  %v28 = vld [vmem:[%s1] sm:$0x3]
  %v29 = vld [vmem:[%s2] sm:$0xff]
  %v30 = vld [vmem:[%s2 + $0x8] sm:$0xff]
  %v31 = vld [vmem:[%s2 + $0x10] sm:$0xff]
  %v32 = vld [vmem:[%s2 + $0x18] sm:$0xff]
  %v33 = vld [vmem:[%s2 + $0x20] sm:$0xff]
  %v34 = vld [vmem:[%s2 + $0x28] sm:$0xff]
  %v35 = vld [vmem:[%s2 + $0x30] sm:$0xff]
  %v36 = vld [vmem:[%s2 + $0x38] sm:$0xff]
  %v37 = vld [vmem:[%s2 + $0x40] sm:$0xff]
  %v38 = vld [vmem:[%s2 + $0x48] sm:$0xff]
  %v39 = vld [vmem:[%s2 + $0x50] sm:$0xff]
  %v40 = vld [vmem:[%s2 + $0x58] sm:$0xff]
  %v41 = vld [vmem:[%s2 + $0x60] sm:$0xff]
  %v42 = vld [vmem:[%s2 + $0x68] sm:$0xff]
  %v43 = vld [vmem:[%s2 + $0x70] sm:$0xff]
  %v44 = vld [vmem:[%s2 + $0x78] sm:$0xff]
  %v45 = vld [vmem:[%s3] sm:$0x3]
  %v46 = vlaneseq
  %v47 = vand.u32 %v46, 127
  %v48 = vadd.s32 %v47, 128
  %vm49 = vcmp.ge.s32.totalorder %v47, 128
  %vm50 = vcmp.ge.s32.totalorder %v48, 128
  %vm51 = vcmp.lt.s32.totalorder %v47, 192
  %vm52 = vcmp.lt.s32.totalorder %v48, 192
  %vm53 = vmand %vm49, %vm51
  %vm54 = vmand %vm50, %vm52
  %v55 = vsel %vm53, 1.0, 0.5
  %v56 = vsel %vm54, 1.0, 0.5
  %v57 = vsel %vm53, 0.0, 0.5
  %v58 = vsel %vm54, 0.0, 0.5
  %v59 = vld [vmem:[%s0] sm:$0xff]
  %61 = vset.pattern.permute.xlu0 0
  %62 = vperm.xlu0 %61, %v59
  %v63 = vpop.permute.xlu0 %62
  %v66 = vlaneseq
  %v67 = vshrl.u32 %v66, 7
  %v68 = vsub.s32 0, %v67
  %v69 = vrot.slane %v28, %v68
  %v70 = vlaneseq
  %v71 = vshrl.u32 %v70, 7
  %v72 = vsub.s32 1, %v71
  %v73 = vrot.slane %v28, %v72
  %v76 = vmul.f32 %v63, %v69
  %v77 = vmul.f32 %v63, %v73
  %v79 = vlaneseq
  %v80 = vshrl.u32 %v79, 7
  %v81 = vsub.s32 0, %v80
  %v82 = vrot.slane %v45, %v81
  %v83 = vlaneseq
  %v84 = vshrl.u32 %v83, 7
  %v85 = vsub.s32 1, %v84
  %v86 = vrot.slane %v45, %v85
  %v89 = vadd.f32 %v76, %v82
  %v90 = vadd.f32 %v77, %v86
  %vm91 = vcmask 523264
  %v93 = vsel %vm91, 0.0, 0
  %95 = vmatprep.subr.mxu0 0.0
  %96 = vmatpush1.msra.mxu0 0.0
  %97 = vmatprep.subr.mxu0 0.0
  %98 = vmatpush1.msra.mxu0 0.0
  %99 = vmatprep.subr.mxu0 0.0
  %100 = vmatpush1.msra.mxu0 0.0
  %101 = vmatprep.subr.mxu0 0.0
  %102 = vmatpush1.msra.mxu0 0.0
  %103 = vmatprep.subr.mxu0 0.0
  %104 = vmatpush1.msra.mxu0 0.0
  %105 = vmatprep.subr.mxu0 0.0
  %106 = vmatpush1.msra.mxu0 0.0
  %107 = vmatprep.subr.mxu0 0.0
  %108 = vmatpush1.msra.mxu0 0.0
  %109 = vmatprep.subr.mxu0 0.0
  %110 = vmatpush1.msra.mxu0 0.0
  %111 = vmatprep.subr.mxu0 %v44
  %112 = vmatpush1.msra.mxu0 %v43
  %113 = vmatprep.subr.mxu0 %v42
  %114 = vmatpush1.msra.mxu0 %v41
  %115 = vmatprep.subr.mxu0 %v40
  %116 = vmatpush1.msra.mxu0 %v39
  %117 = vmatprep.subr.mxu0 %v38
  %118 = vmatpush1.msra.mxu0 %v37
  %119 = vmatprep.subr.mxu0 %v36
  %120 = vmatpush1.msra.mxu0 %v35
  %121 = vmatprep.subr.mxu0 %v34
  %122 = vmatpush1.msra.mxu0 %v33
  %123 = vmatprep.subr.mxu0 %v32
  %124 = vmatpush1.msra.mxu0 %v31
  %125 = vmatprep.subr.mxu0 %v30
  %126 = vmatpush1.msra.mxu0 %v29
  %127 = vmatprep.subr.mxu0 0.0
  %128 = vmatpush2.msra.mxu0 0.0
  %129 = vmatprep.subr.mxu0 0.0
  %130 = vmatpush2.msra.mxu0 0.0
  %131 = vmatprep.subr.mxu0 0.0
  %132 = vmatpush2.msra.mxu0 0.0
  %133 = vmatprep.subr.mxu0 0.0
  %134 = vmatpush2.msra.mxu0 0.0
  %135 = vmatprep.subr.mxu0 0.0
  %136 = vmatpush2.msra.mxu0 0.0
  %137 = vmatprep.subr.mxu0 0.0
  %138 = vmatpush2.msra.mxu0 0.0
  %139 = vmatprep.subr.mxu0 0.0
  %140 = vmatpush2.msra.mxu0 0.0
  %141 = vmatprep.subr.mxu0 0.0
  %142 = vmatpush2.msra.mxu0 0.0
  %143 = vmatprep.subr.mxu0 0.0
  %144 = vmatpush2.msra.mxu0 0.0
  %145 = vmatprep.subr.mxu0 0.0
  %146 = vmatpush2.msra.mxu0 0.0
  %147 = vmatprep.subr.mxu0 0.0
  %148 = vmatpush2.msra.mxu0 0.0
  %149 = vmatprep.subr.mxu0 0.0
  %150 = vmatpush2.msra.mxu0 0.0
  %151 = vmatprep.subr.mxu0 0.0
  %152 = vmatpush2.msra.mxu0 0.0
  %153 = vmatprep.subr.mxu0 0.0
  %154 = vmatpush2.msra.mxu0 0.0
  %155 = vmatprep.subr.mxu0 0.0
  %156 = vmatpush2.msra.mxu0 0.0
  %157 = vmatprep.subr.mxu0 0.0
  %158 = vmatpush2.msra.mxu0 0.0
  %159 = vmatprep.mubr.f32.mxu0 0.0
  %160 = vmatmul.mubr.f32.gmra.mxu0 %v93
  %v161 = vpop.f32.mrf.mxu0
  %v162 = vadd.f32 0.0, %v161
  %v163 = vpop.f32.mrf.mxu0
  %v164 = vadd.f32 0.0, %v163
  %165 = vdwg.mxu0
  %v166 = vadd.f32 %v89, %v162
  %v167 = vadd.f32 %v90, %v164
  %v168 = vtanh.pop %v166
  %v169 = vtanh.pop %v167
  %v170 = vmul.f32 %v168, %v55
  %v171 = vmul.f32 %v169, %v56
  %v172 = vadd.f32 %v170, %v57
  %v173 = vadd.f32 %v171, %v58
  %v174 = vmul.f32 %v172, 0.0
  %v175 = vmul.f32 %v172, %v173
  %177 = vrot.lane.b32.xlu0 %v175, 64
  %v178 = vpop.permute.xlu0 %177
  %v180 = vadd.f32 %v174, %v178
  %v181 = vtanh.pop %v180
  %v182 = vmul.f32 %v173, %v181
  %v183 = vld [vmem:[%s0 + $0x8] sm:$0xff]
  %185 = vset.pattern.permute.xlu0 0
  %186 = vperm.xlu0 %185, %v183
  %v187 = vpop.permute.xlu0 %186
  %v189 = vmul.f32 %v187, %v69
  %v190 = vmul.f32 %v187, %v73
  %v191 = vadd.f32 %v189, %v82
  %v192 = vadd.f32 %v190, %v86
  %194 = vrot.lane.b32.xlu0 %v182, 64
  %v195 = vpop.permute.xlu0 %194
  %v196 = vsel %vm91, %v195, 0
  %198 = vmatprep.subr.mxu0 0.0
  %199 = vmatpush1.msra.mxu0 0.0
  %200 = vmatprep.subr.mxu0 0.0
  %201 = vmatpush1.msra.mxu0 0.0
  %202 = vmatprep.subr.mxu0 0.0
  %203 = vmatpush1.msra.mxu0 0.0
  %204 = vmatprep.subr.mxu0 0.0
  %205 = vmatpush1.msra.mxu0 0.0
  %206 = vmatprep.subr.mxu0 0.0
  %207 = vmatpush1.msra.mxu0 0.0
  %208 = vmatprep.subr.mxu0 0.0
  %209 = vmatpush1.msra.mxu0 0.0
  %210 = vmatprep.subr.mxu0 0.0
  %211 = vmatpush1.msra.mxu0 0.0
  %212 = vmatprep.subr.mxu0 0.0
  %213 = vmatpush1.msra.mxu0 0.0
  %214 = vmatprep.subr.mxu0 %v44
  %215 = vmatpush1.msra.mxu0 %v43
  %216 = vmatprep.subr.mxu0 %v42
  %217 = vmatpush1.msra.mxu0 %v41
  %218 = vmatprep.subr.mxu0 %v40
  %219 = vmatpush1.msra.mxu0 %v39
  %220 = vmatprep.subr.mxu0 %v38
  %221 = vmatpush1.msra.mxu0 %v37
  %222 = vmatprep.subr.mxu0 %v36
  %223 = vmatpush1.msra.mxu0 %v35
  %224 = vmatprep.subr.mxu0 %v34
  %225 = vmatpush1.msra.mxu0 %v33
  %226 = vmatprep.subr.mxu0 %v32
  %227 = vmatpush1.msra.mxu0 %v31
  %228 = vmatprep.subr.mxu0 %v30
  %229 = vmatpush1.msra.mxu0 %v29
  %230 = vmatprep.subr.mxu0 0.0
  %231 = vmatpush2.msra.mxu0 0.0
  %232 = vmatprep.subr.mxu0 0.0
  %233 = vmatpush2.msra.mxu0 0.0
  %234 = vmatprep.subr.mxu0 0.0
  %235 = vmatpush2.msra.mxu0 0.0
  %236 = vmatprep.subr.mxu0 0.0
  %237 = vmatpush2.msra.mxu0 0.0
  %238 = vmatprep.subr.mxu0 0.0
  %239 = vmatpush2.msra.mxu0 0.0
  %240 = vmatprep.subr.mxu0 0.0
  %241 = vmatpush2.msra.mxu0 0.0
  %242 = vmatprep.subr.mxu0 0.0
  %243 = vmatpush2.msra.mxu0 0.0
  %244 = vmatprep.subr.mxu0 0.0
  %245 = vmatpush2.msra.mxu0 0.0
  %246 = vmatprep.subr.mxu0 0.0
  %247 = vmatpush2.msra.mxu0 0.0
  %248 = vmatprep.subr.mxu0 0.0
  %249 = vmatpush2.msra.mxu0 0.0
  %250 = vmatprep.subr.mxu0 0.0
  %251 = vmatpush2.msra.mxu0 0.0
  %252 = vmatprep.subr.mxu0 0.0
  %253 = vmatpush2.msra.mxu0 0.0
  %254 = vmatprep.subr.mxu0 0.0
  %255 = vmatpush2.msra.mxu0 0.0
  %256 = vmatprep.subr.mxu0 0.0
  %257 = vmatpush2.msra.mxu0 0.0
  %258 = vmatprep.subr.mxu0 0.0
  %259 = vmatpush2.msra.mxu0 0.0
  %260 = vmatprep.subr.mxu0 0.0
  %261 = vmatpush2.msra.mxu0 0.0
  %262 = vmatprep.mubr.f32.mxu0 0.0
  %263 = vmatmul.mubr.f32.gmra.mxu0 %v196
  %v264 = vpop.f32.mrf.mxu0
  %v265 = vadd.f32 0.0, %v264
  %v266 = vpop.f32.mrf.mxu0
  %v267 = vadd.f32 0.0, %v266
  %268 = vdwg.mxu0
  %v269 = vadd.f32 %v191, %v265
  %v270 = vadd.f32 %v192, %v267
  %v271 = vtanh.pop %v269
  %v272 = vtanh.pop %v270
  %v273 = vmul.f32 %v271, %v55
  %v274 = vmul.f32 %v272, %v56
  %v275 = vadd.f32 %v273, %v57
  %v276 = vadd.f32 %v274, %v58
  %v277 = vmul.f32 %v275, %v180
  %v278 = vmul.f32 %v275, %v276
  %280 = vrot.lane.b32.xlu0 %v278, 64
  %v281 = vpop.permute.xlu0 %280
  %v283 = vadd.f32 %v277, %v281
  %v284 = vtanh.pop %v283
  %v285 = vmul.f32 %v276, %v284
  %v286 = vld [vmem:[%s0 + $0x10] sm:$0xff]
  %288 = vset.pattern.permute.xlu0 0
  %289 = vperm.xlu0 %288, %v286
  %v290 = vpop.permute.xlu0 %289
  %v292 = vmul.f32 %v290, %v69
  %v293 = vmul.f32 %v290, %v73
  %v294 = vadd.f32 %v292, %v82
  %v295 = vadd.f32 %v293, %v86
  %297 = vrot.lane.b32.xlu0 %v285, 64
  %v298 = vpop.permute.xlu0 %297
  %v299 = vsel %vm91, %v298, 0
  %301 = vmatprep.subr.mxu0 0.0
  %302 = vmatpush1.msra.mxu0 0.0
  %303 = vmatprep.subr.mxu0 0.0
  %304 = vmatpush1.msra.mxu0 0.0
  %305 = vmatprep.subr.mxu0 0.0
  %306 = vmatpush1.msra.mxu0 0.0
  %307 = vmatprep.subr.mxu0 0.0
  %308 = vmatpush1.msra.mxu0 0.0
  %309 = vmatprep.subr.mxu0 0.0
  %310 = vmatpush1.msra.mxu0 0.0
  %311 = vmatprep.subr.mxu0 0.0
  %312 = vmatpush1.msra.mxu0 0.0
  %313 = vmatprep.subr.mxu0 0.0
  %314 = vmatpush1.msra.mxu0 0.0
  %315 = vmatprep.subr.mxu0 0.0
  %316 = vmatpush1.msra.mxu0 0.0
  %317 = vmatprep.subr.mxu0 %v44
  %318 = vmatpush1.msra.mxu0 %v43
  %319 = vmatprep.subr.mxu0 %v42
  %320 = vmatpush1.msra.mxu0 %v41
  %321 = vmatprep.subr.mxu0 %v40
  %322 = vmatpush1.msra.mxu0 %v39
  %323 = vmatprep.subr.mxu0 %v38
  %324 = vmatpush1.msra.mxu0 %v37
  %325 = vmatprep.subr.mxu0 %v36
  %326 = vmatpush1.msra.mxu0 %v35
  %327 = vmatprep.subr.mxu0 %v34
  %328 = vmatpush1.msra.mxu0 %v33
  %329 = vmatprep.subr.mxu0 %v32
  %330 = vmatpush1.msra.mxu0 %v31
  %331 = vmatprep.subr.mxu0 %v30
  %332 = vmatpush1.msra.mxu0 %v29
  %333 = vmatprep.subr.mxu0 0.0
  %334 = vmatpush2.msra.mxu0 0.0
  %335 = vmatprep.subr.mxu0 0.0
  %336 = vmatpush2.msra.mxu0 0.0
  %337 = vmatprep.subr.mxu0 0.0
  %338 = vmatpush2.msra.mxu0 0.0
  %339 = vmatprep.subr.mxu0 0.0
  %340 = vmatpush2.msra.mxu0 0.0
  %341 = vmatprep.subr.mxu0 0.0
  %342 = vmatpush2.msra.mxu0 0.0
  %343 = vmatprep.subr.mxu0 0.0
  %344 = vmatpush2.msra.mxu0 0.0
  %345 = vmatprep.subr.mxu0 0.0
  %346 = vmatpush2.msra.mxu0 0.0
  %347 = vmatprep.subr.mxu0 0.0
  %348 = vmatpush2.msra.mxu0 0.0
  %349 = vmatprep.subr.mxu0 0.0
  %350 = vmatpush2.msra.mxu0 0.0
  %351 = vmatprep.subr.mxu0 0.0
  %352 = vmatpush2.msra.mxu0 0.0
  %353 = vmatprep.subr.mxu0 0.0
  %354 = vmatpush2.msra.mxu0 0.0
  %355 = vmatprep.subr.mxu0 0.0
  %356 = vmatpush2.msra.mxu0 0.0
  %357 = vmatprep.subr.mxu0 0.0
  %358 = vmatpush2.msra.mxu0 0.0
  %359 = vmatprep.subr.mxu0 0.0
  %360 = vmatpush2.msra.mxu0 0.0
  %361 = vmatprep.subr.mxu0 0.0
  %362 = vmatpush2.msra.mxu0 0.0
  %363 = vmatprep.subr.mxu0 0.0
  %364 = vmatpush2.msra.mxu0 0.0
  %365 = vmatprep.mubr.f32.mxu0 0.0
  %366 = vmatmul.mubr.f32.gmra.mxu0 %v299
  %v367 = vpop.f32.mrf.mxu0
  %v368 = vadd.f32 0.0, %v367
  %v369 = vpop.f32.mrf.mxu0
  %v370 = vadd.f32 0.0, %v369
  %371 = vdwg.mxu0
  %v372 = vadd.f32 %v294, %v368
  %v373 = vadd.f32 %v295, %v370
  %v374 = vtanh.pop %v372
  %v375 = vtanh.pop %v373
  %v376 = vmul.f32 %v374, %v55
  %v377 = vmul.f32 %v375, %v56
  %v378 = vadd.f32 %v376, %v57
  %v379 = vadd.f32 %v377, %v58
  %v380 = vmul.f32 %v378, %v283
  %v381 = vmul.f32 %v378, %v379
  %383 = vrot.lane.b32.xlu0 %v381, 64
  %v384 = vpop.permute.xlu0 %383
  %v386 = vadd.f32 %v380, %v384
  %v387 = vtanh.pop %v386
  %v388 = vmul.f32 %v379, %v387
  %v389 = vld [vmem:[%s0 + $0x18] sm:$0xff]
  %391 = vset.pattern.permute.xlu0 0
  %392 = vperm.xlu0 %391, %v389
  %v393 = vpop.permute.xlu0 %392
  %v395 = vmul.f32 %v393, %v69
  %v396 = vmul.f32 %v393, %v73
  %v397 = vadd.f32 %v395, %v82
  %v398 = vadd.f32 %v396, %v86
  %400 = vrot.lane.b32.xlu0 %v388, 64
  %v401 = vpop.permute.xlu0 %400
  %v402 = vsel %vm91, %v401, 0
  %404 = vmatprep.subr.mxu0 0.0
  %405 = vmatpush1.msra.mxu0 0.0
  %406 = vmatprep.subr.mxu0 0.0
  %407 = vmatpush1.msra.mxu0 0.0
  %408 = vmatprep.subr.mxu0 0.0
  %409 = vmatpush1.msra.mxu0 0.0
  %410 = vmatprep.subr.mxu0 0.0
  %411 = vmatpush1.msra.mxu0 0.0
  %412 = vmatprep.subr.mxu0 0.0
  %413 = vmatpush1.msra.mxu0 0.0
  %414 = vmatprep.subr.mxu0 0.0
  %415 = vmatpush1.msra.mxu0 0.0
  %416 = vmatprep.subr.mxu0 0.0
  %417 = vmatpush1.msra.mxu0 0.0
  %418 = vmatprep.subr.mxu0 0.0
  %419 = vmatpush1.msra.mxu0 0.0
  %420 = vmatprep.subr.mxu0 %v44
  %421 = vmatpush1.msra.mxu0 %v43
  %422 = vmatprep.subr.mxu0 %v42
  %423 = vmatpush1.msra.mxu0 %v41
  %424 = vmatprep.subr.mxu0 %v40
  %425 = vmatpush1.msra.mxu0 %v39
  %426 = vmatprep.subr.mxu0 %v38
  %427 = vmatpush1.msra.mxu0 %v37
  %428 = vmatprep.subr.mxu0 %v36
  %429 = vmatpush1.msra.mxu0 %v35
  %430 = vmatprep.subr.mxu0 %v34
  %431 = vmatpush1.msra.mxu0 %v33
  %432 = vmatprep.subr.mxu0 %v32
  %433 = vmatpush1.msra.mxu0 %v31
  %434 = vmatprep.subr.mxu0 %v30
  %435 = vmatpush1.msra.mxu0 %v29
  %436 = vmatprep.subr.mxu0 0.0
  %437 = vmatpush2.msra.mxu0 0.0
  %438 = vmatprep.subr.mxu0 0.0
  %439 = vmatpush2.msra.mxu0 0.0
  %440 = vmatprep.subr.mxu0 0.0
  %441 = vmatpush2.msra.mxu0 0.0
  %442 = vmatprep.subr.mxu0 0.0
  %443 = vmatpush2.msra.mxu0 0.0
  %444 = vmatprep.subr.mxu0 0.0
  %445 = vmatpush2.msra.mxu0 0.0
  %446 = vmatprep.subr.mxu0 0.0
  %447 = vmatpush2.msra.mxu0 0.0
  %448 = vmatprep.subr.mxu0 0.0
  %449 = vmatpush2.msra.mxu0 0.0
  %450 = vmatprep.subr.mxu0 0.0
  %451 = vmatpush2.msra.mxu0 0.0
  %452 = vmatprep.subr.mxu0 0.0
  %453 = vmatpush2.msra.mxu0 0.0
  %454 = vmatprep.subr.mxu0 0.0
  %455 = vmatpush2.msra.mxu0 0.0
  %456 = vmatprep.subr.mxu0 0.0
  %457 = vmatpush2.msra.mxu0 0.0
  %458 = vmatprep.subr.mxu0 0.0
  %459 = vmatpush2.msra.mxu0 0.0
  %460 = vmatprep.subr.mxu0 0.0
  %461 = vmatpush2.msra.mxu0 0.0
  %462 = vmatprep.subr.mxu0 0.0
  %463 = vmatpush2.msra.mxu0 0.0
  %464 = vmatprep.subr.mxu0 0.0
  %465 = vmatpush2.msra.mxu0 0.0
  %466 = vmatprep.subr.mxu0 0.0
  %467 = vmatpush2.msra.mxu0 0.0
  %468 = vmatprep.mubr.f32.mxu0 0.0
  %469 = vmatmul.mubr.f32.gmra.mxu0 %v402
  %v470 = vpop.f32.mrf.mxu0
  %v471 = vadd.f32 0.0, %v470
  %v472 = vpop.f32.mrf.mxu0
  %v473 = vadd.f32 0.0, %v472
  %474 = vdwg.mxu0
  %v475 = vadd.f32 %v397, %v471
  %v476 = vadd.f32 %v398, %v473
  %v477 = vtanh.pop %v475
  %v478 = vtanh.pop %v476
  %v479 = vmul.f32 %v477, %v55
  %v480 = vmul.f32 %v478, %v56
  %v481 = vadd.f32 %v479, %v57
  %v482 = vadd.f32 %v480, %v58
  %v483 = vmul.f32 %v481, %v386
  %v484 = vmul.f32 %v481, %v482
  %486 = vrot.lane.b32.xlu0 %v484, 64
  %v487 = vpop.permute.xlu0 %486
  %v489 = vadd.f32 %v483, %v487
  %v490 = vtanh.pop %v489
  %v491 = vmul.f32 %v482, %v490
  %v492 = vld [vmem:[%s0 + $0x20] sm:$0xff]
  %494 = vset.pattern.permute.xlu0 0
  %495 = vperm.xlu0 %494, %v492
  %v496 = vpop.permute.xlu0 %495
  %v498 = vmul.f32 %v496, %v69
  %v499 = vmul.f32 %v496, %v73
  %v500 = vadd.f32 %v498, %v82
  %v501 = vadd.f32 %v499, %v86
  %503 = vrot.lane.b32.xlu0 %v491, 64
  %v504 = vpop.permute.xlu0 %503
  %v505 = vsel %vm91, %v504, 0
  %507 = vmatprep.subr.mxu0 0.0
  %508 = vmatpush1.msra.mxu0 0.0
  %509 = vmatprep.subr.mxu0 0.0
  %510 = vmatpush1.msra.mxu0 0.0
  %511 = vmatprep.subr.mxu0 0.0
  %512 = vmatpush1.msra.mxu0 0.0
  %513 = vmatprep.subr.mxu0 0.0
  %514 = vmatpush1.msra.mxu0 0.0
  %515 = vmatprep.subr.mxu0 0.0
  %516 = vmatpush1.msra.mxu0 0.0
  %517 = vmatprep.subr.mxu0 0.0
  %518 = vmatpush1.msra.mxu0 0.0
  %519 = vmatprep.subr.mxu0 0.0
  %520 = vmatpush1.msra.mxu0 0.0
  %521 = vmatprep.subr.mxu0 0.0
  %522 = vmatpush1.msra.mxu0 0.0
  %523 = vmatprep.subr.mxu0 %v44
  %524 = vmatpush1.msra.mxu0 %v43
  %525 = vmatprep.subr.mxu0 %v42
  %526 = vmatpush1.msra.mxu0 %v41
  %527 = vmatprep.subr.mxu0 %v40
  %528 = vmatpush1.msra.mxu0 %v39
  %529 = vmatprep.subr.mxu0 %v38
  %530 = vmatpush1.msra.mxu0 %v37
  %531 = vmatprep.subr.mxu0 %v36
  %532 = vmatpush1.msra.mxu0 %v35
  %533 = vmatprep.subr.mxu0 %v34
  %534 = vmatpush1.msra.mxu0 %v33
  %535 = vmatprep.subr.mxu0 %v32
  %536 = vmatpush1.msra.mxu0 %v31
  %537 = vmatprep.subr.mxu0 %v30
  %538 = vmatpush1.msra.mxu0 %v29
  %539 = vmatprep.subr.mxu0 0.0
  %540 = vmatpush2.msra.mxu0 0.0
  %541 = vmatprep.subr.mxu0 0.0
  %542 = vmatpush2.msra.mxu0 0.0
  %543 = vmatprep.subr.mxu0 0.0
  %544 = vmatpush2.msra.mxu0 0.0
  %545 = vmatprep.subr.mxu0 0.0
  %546 = vmatpush2.msra.mxu0 0.0
  %547 = vmatprep.subr.mxu0 0.0
  %548 = vmatpush2.msra.mxu0 0.0
  %549 = vmatprep.subr.mxu0 0.0
  %550 = vmatpush2.msra.mxu0 0.0
  %551 = vmatprep.subr.mxu0 0.0
  %552 = vmatpush2.msra.mxu0 0.0
  %553 = vmatprep.subr.mxu0 0.0
  %554 = vmatpush2.msra.mxu0 0.0
  %555 = vmatprep.subr.mxu0 0.0
  %556 = vmatpush2.msra.mxu0 0.0
  %557 = vmatprep.subr.mxu0 0.0
  %558 = vmatpush2.msra.mxu0 0.0
  %559 = vmatprep.subr.mxu0 0.0
  %560 = vmatpush2.msra.mxu0 0.0
  %561 = vmatprep.subr.mxu0 0.0
  %562 = vmatpush2.msra.mxu0 0.0
  %563 = vmatprep.subr.mxu0 0.0
  %564 = vmatpush2.msra.mxu0 0.0
  %565 = vmatprep.subr.mxu0 0.0
  %566 = vmatpush2.msra.mxu0 0.0
  %567 = vmatprep.subr.mxu0 0.0
  %568 = vmatpush2.msra.mxu0 0.0
  %569 = vmatprep.subr.mxu0 0.0
  %570 = vmatpush2.msra.mxu0 0.0
  %571 = vmatprep.mubr.f32.mxu0 0.0
  %572 = vmatmul.mubr.f32.gmra.mxu0 %v505
  %v573 = vpop.f32.mrf.mxu0
  %v574 = vadd.f32 0.0, %v573
  %v575 = vpop.f32.mrf.mxu0
  %v576 = vadd.f32 0.0, %v575
  %577 = vdwg.mxu0
  %v578 = vadd.f32 %v500, %v574
  %v579 = vadd.f32 %v501, %v576
  %v580 = vtanh.pop %v578
  %v581 = vtanh.pop %v579
  %v582 = vmul.f32 %v580, %v55
  %v583 = vmul.f32 %v581, %v56
  %v584 = vadd.f32 %v582, %v57
  %v585 = vadd.f32 %v583, %v58
  %v586 = vmul.f32 %v584, %v489
  %v587 = vmul.f32 %v584, %v585
  %589 = vrot.lane.b32.xlu0 %v587, 64
  %v590 = vpop.permute.xlu0 %589
  %v592 = vadd.f32 %v586, %v590
  %v593 = vtanh.pop %v592
  %v594 = vmul.f32 %v585, %v593
  %v595 = vld [vmem:[%s0 + $0x28] sm:$0xff]
  %597 = vset.pattern.permute.xlu0 0
  %598 = vperm.xlu0 %597, %v595
  %v599 = vpop.permute.xlu0 %598
  %v601 = vmul.f32 %v599, %v69
  %v602 = vmul.f32 %v599, %v73
  %v603 = vadd.f32 %v601, %v82
  %v604 = vadd.f32 %v602, %v86
  %606 = vrot.lane.b32.xlu0 %v594, 64
  %v607 = vpop.permute.xlu0 %606
  %v608 = vsel %vm91, %v607, 0
  %610 = vmatprep.subr.mxu0 0.0
  %611 = vmatpush1.msra.mxu0 0.0
  %612 = vmatprep.subr.mxu0 0.0
  %613 = vmatpush1.msra.mxu0 0.0
  %614 = vmatprep.subr.mxu0 0.0
  %615 = vmatpush1.msra.mxu0 0.0
  %616 = vmatprep.subr.mxu0 0.0
  %617 = vmatpush1.msra.mxu0 0.0
  %618 = vmatprep.subr.mxu0 0.0
  %619 = vmatpush1.msra.mxu0 0.0
  %620 = vmatprep.subr.mxu0 0.0
  %621 = vmatpush1.msra.mxu0 0.0
  %622 = vmatprep.subr.mxu0 0.0
  %623 = vmatpush1.msra.mxu0 0.0
  %624 = vmatprep.subr.mxu0 0.0
  %625 = vmatpush1.msra.mxu0 0.0
  %626 = vmatprep.subr.mxu0 %v44
  %627 = vmatpush1.msra.mxu0 %v43
  %628 = vmatprep.subr.mxu0 %v42
  %629 = vmatpush1.msra.mxu0 %v41
  %630 = vmatprep.subr.mxu0 %v40
  %631 = vmatpush1.msra.mxu0 %v39
  %632 = vmatprep.subr.mxu0 %v38
  %633 = vmatpush1.msra.mxu0 %v37
  %634 = vmatprep.subr.mxu0 %v36
  %635 = vmatpush1.msra.mxu0 %v35
  %636 = vmatprep.subr.mxu0 %v34
  %637 = vmatpush1.msra.mxu0 %v33
  %638 = vmatprep.subr.mxu0 %v32
  %639 = vmatpush1.msra.mxu0 %v31
  %640 = vmatprep.subr.mxu0 %v30
  %641 = vmatpush1.msra.mxu0 %v29
  %642 = vmatprep.subr.mxu0 0.0
  %643 = vmatpush2.msra.mxu0 0.0
  %644 = vmatprep.subr.mxu0 0.0
  %645 = vmatpush2.msra.mxu0 0.0
  %646 = vmatprep.subr.mxu0 0.0
  %647 = vmatpush2.msra.mxu0 0.0
  %648 = vmatprep.subr.mxu0 0.0
  %649 = vmatpush2.msra.mxu0 0.0
  %650 = vmatprep.subr.mxu0 0.0
  %651 = vmatpush2.msra.mxu0 0.0
  %652 = vmatprep.subr.mxu0 0.0
  %653 = vmatpush2.msra.mxu0 0.0
  %654 = vmatprep.subr.mxu0 0.0
  %655 = vmatpush2.msra.mxu0 0.0
  %656 = vmatprep.subr.mxu0 0.0
  %657 = vmatpush2.msra.mxu0 0.0
  %658 = vmatprep.subr.mxu0 0.0
  %659 = vmatpush2.msra.mxu0 0.0
  %660 = vmatprep.subr.mxu0 0.0
  %661 = vmatpush2.msra.mxu0 0.0
  %662 = vmatprep.subr.mxu0 0.0
  %663 = vmatpush2.msra.mxu0 0.0
  %664 = vmatprep.subr.mxu0 0.0
  %665 = vmatpush2.msra.mxu0 0.0
  %666 = vmatprep.subr.mxu0 0.0
  %667 = vmatpush2.msra.mxu0 0.0
  %668 = vmatprep.subr.mxu0 0.0
  %669 = vmatpush2.msra.mxu0 0.0
  %670 = vmatprep.subr.mxu0 0.0
  %671 = vmatpush2.msra.mxu0 0.0
  %672 = vmatprep.subr.mxu0 0.0
  %673 = vmatpush2.msra.mxu0 0.0
  %674 = vmatprep.mubr.f32.mxu0 0.0
  %675 = vmatmul.mubr.f32.gmra.mxu0 %v608
  %v676 = vpop.f32.mrf.mxu0
  %v677 = vadd.f32 0.0, %v676
  %v678 = vpop.f32.mrf.mxu0
  %v679 = vadd.f32 0.0, %v678
  %680 = vdwg.mxu0
  %v681 = vadd.f32 %v603, %v677
  %v682 = vadd.f32 %v604, %v679
  %v683 = vtanh.pop %v681
  %v684 = vtanh.pop %v682
  %v685 = vmul.f32 %v683, %v55
  %v686 = vmul.f32 %v684, %v56
  %v687 = vadd.f32 %v685, %v57
  %v688 = vadd.f32 %v686, %v58
  %v689 = vmul.f32 %v687, %v592
  %v690 = vmul.f32 %v687, %v688
  %692 = vrot.lane.b32.xlu0 %v690, 64
  %v693 = vpop.permute.xlu0 %692
  %v695 = vadd.f32 %v689, %v693
  %v696 = vtanh.pop %v695
  %v697 = vmul.f32 %v688, %v696
  %v698 = vld [vmem:[%s0 + $0x30] sm:$0xff]
  %700 = vset.pattern.permute.xlu0 0
  %701 = vperm.xlu0 %700, %v698
  %v702 = vpop.permute.xlu0 %701
  %v704 = vmul.f32 %v702, %v69
  %v705 = vmul.f32 %v702, %v73
  %v706 = vadd.f32 %v704, %v82
  %v707 = vadd.f32 %v705, %v86
  %709 = vrot.lane.b32.xlu0 %v697, 64
  %v710 = vpop.permute.xlu0 %709
  %v711 = vsel %vm91, %v710, 0
  %713 = vmatprep.subr.mxu0 0.0
  %714 = vmatpush1.msra.mxu0 0.0
  %715 = vmatprep.subr.mxu0 0.0
  %716 = vmatpush1.msra.mxu0 0.0
  %717 = vmatprep.subr.mxu0 0.0
  %718 = vmatpush1.msra.mxu0 0.0
  %719 = vmatprep.subr.mxu0 0.0
  %720 = vmatpush1.msra.mxu0 0.0
  %721 = vmatprep.subr.mxu0 0.0
  %722 = vmatpush1.msra.mxu0 0.0
  %723 = vmatprep.subr.mxu0 0.0
  %724 = vmatpush1.msra.mxu0 0.0
  %725 = vmatprep.subr.mxu0 0.0
  %726 = vmatpush1.msra.mxu0 0.0
  %727 = vmatprep.subr.mxu0 0.0
  %728 = vmatpush1.msra.mxu0 0.0
  %729 = vmatprep.subr.mxu0 %v44
  %730 = vmatpush1.msra.mxu0 %v43
  %731 = vmatprep.subr.mxu0 %v42
  %732 = vmatpush1.msra.mxu0 %v41
  %733 = vmatprep.subr.mxu0 %v40
  %734 = vmatpush1.msra.mxu0 %v39
  %735 = vmatprep.subr.mxu0 %v38
  %736 = vmatpush1.msra.mxu0 %v37
  %737 = vmatprep.subr.mxu0 %v36
  %738 = vmatpush1.msra.mxu0 %v35
  %739 = vmatprep.subr.mxu0 %v34
  %740 = vmatpush1.msra.mxu0 %v33
  %741 = vmatprep.subr.mxu0 %v32
  %742 = vmatpush1.msra.mxu0 %v31
  %743 = vmatprep.subr.mxu0 %v30
  %744 = vmatpush1.msra.mxu0 %v29
  %745 = vmatprep.subr.mxu0 0.0
  %746 = vmatpush2.msra.mxu0 0.0
  %747 = vmatprep.subr.mxu0 0.0
  %748 = vmatpush2.msra.mxu0 0.0
  %749 = vmatprep.subr.mxu0 0.0
  %750 = vmatpush2.msra.mxu0 0.0
  %751 = vmatprep.subr.mxu0 0.0
  %752 = vmatpush2.msra.mxu0 0.0
  %753 = vmatprep.subr.mxu0 0.0
  %754 = vmatpush2.msra.mxu0 0.0
  %755 = vmatprep.subr.mxu0 0.0
  %756 = vmatpush2.msra.mxu0 0.0
  %757 = vmatprep.subr.mxu0 0.0
  %758 = vmatpush2.msra.mxu0 0.0
  %759 = vmatprep.subr.mxu0 0.0
  %760 = vmatpush2.msra.mxu0 0.0
  %761 = vmatprep.subr.mxu0 0.0
  %762 = vmatpush2.msra.mxu0 0.0
  %763 = vmatprep.subr.mxu0 0.0
  %764 = vmatpush2.msra.mxu0 0.0
  %765 = vmatprep.subr.mxu0 0.0
  %766 = vmatpush2.msra.mxu0 0.0
  %767 = vmatprep.subr.mxu0 0.0
  %768 = vmatpush2.msra.mxu0 0.0
  %769 = vmatprep.subr.mxu0 0.0
  %770 = vmatpush2.msra.mxu0 0.0
  %771 = vmatprep.subr.mxu0 0.0
  %772 = vmatpush2.msra.mxu0 0.0
  %773 = vmatprep.subr.mxu0 0.0
  %774 = vmatpush2.msra.mxu0 0.0
  %775 = vmatprep.subr.mxu0 0.0
  %776 = vmatpush2.msra.mxu0 0.0
  %777 = vmatprep.mubr.f32.mxu0 0.0
  %778 = vmatmul.mubr.f32.gmra.mxu0 %v711
  %v779 = vpop.f32.mrf.mxu0
  %v780 = vadd.f32 0.0, %v779
  %v781 = vpop.f32.mrf.mxu0
  %v782 = vadd.f32 0.0, %v781
  %783 = vdwg.mxu0
  %v784 = vadd.f32 %v706, %v780
  %v785 = vadd.f32 %v707, %v782
  %v786 = vtanh.pop %v784
  %v787 = vtanh.pop %v785
  %v788 = vmul.f32 %v786, %v55
  %v789 = vmul.f32 %v787, %v56
  %v790 = vadd.f32 %v788, %v57
  %v791 = vadd.f32 %v789, %v58
  %v792 = vmul.f32 %v790, %v695
  %v793 = vmul.f32 %v790, %v791
  %795 = vrot.lane.b32.xlu0 %v793, 64
  %v796 = vpop.permute.xlu0 %795
  %v798 = vadd.f32 %v792, %v796
  %v799 = vtanh.pop %v798
  %v800 = vmul.f32 %v791, %v799
  %v801 = vld [vmem:[%s0 + $0x38] sm:$0xff]
  %803 = vset.pattern.permute.xlu0 0
  %804 = vperm.xlu0 %803, %v801
  %v805 = vpop.permute.xlu0 %804
  %v807 = vmul.f32 %v805, %v69
  %v808 = vmul.f32 %v805, %v73
  %v809 = vadd.f32 %v807, %v82
  %v810 = vadd.f32 %v808, %v86
  %812 = vrot.lane.b32.xlu0 %v800, 64
  %v813 = vpop.permute.xlu0 %812
  %v814 = vsel %vm91, %v813, 0
  %816 = vmatprep.subr.mxu0 0.0
  %817 = vmatpush1.msra.mxu0 0.0
  %818 = vmatprep.subr.mxu0 0.0
  %819 = vmatpush1.msra.mxu0 0.0
  %820 = vmatprep.subr.mxu0 0.0
  %821 = vmatpush1.msra.mxu0 0.0
  %822 = vmatprep.subr.mxu0 0.0
  %823 = vmatpush1.msra.mxu0 0.0
  %824 = vmatprep.subr.mxu0 0.0
  %825 = vmatpush1.msra.mxu0 0.0
  %826 = vmatprep.subr.mxu0 0.0
  %827 = vmatpush1.msra.mxu0 0.0
  %828 = vmatprep.subr.mxu0 0.0
  %829 = vmatpush1.msra.mxu0 0.0
  %830 = vmatprep.subr.mxu0 0.0
  %831 = vmatpush1.msra.mxu0 0.0
  %832 = vmatprep.subr.mxu0 %v44
  %833 = vmatpush1.msra.mxu0 %v43
  %834 = vmatprep.subr.mxu0 %v42
  %835 = vmatpush1.msra.mxu0 %v41
  %836 = vmatprep.subr.mxu0 %v40
  %837 = vmatpush1.msra.mxu0 %v39
  %838 = vmatprep.subr.mxu0 %v38
  %839 = vmatpush1.msra.mxu0 %v37
  %840 = vmatprep.subr.mxu0 %v36
  %841 = vmatpush1.msra.mxu0 %v35
  %842 = vmatprep.subr.mxu0 %v34
  %843 = vmatpush1.msra.mxu0 %v33
  %844 = vmatprep.subr.mxu0 %v32
  %845 = vmatpush1.msra.mxu0 %v31
  %846 = vmatprep.subr.mxu0 %v30
  %847 = vmatpush1.msra.mxu0 %v29
  %848 = vmatprep.subr.mxu0 0.0
  %849 = vmatpush2.msra.mxu0 0.0
  %850 = vmatprep.subr.mxu0 0.0
  %851 = vmatpush2.msra.mxu0 0.0
  %852 = vmatprep.subr.mxu0 0.0
  %853 = vmatpush2.msra.mxu0 0.0
  %854 = vmatprep.subr.mxu0 0.0
  %855 = vmatpush2.msra.mxu0 0.0
  %856 = vmatprep.subr.mxu0 0.0
  %857 = vmatpush2.msra.mxu0 0.0
  %858 = vmatprep.subr.mxu0 0.0
  %859 = vmatpush2.msra.mxu0 0.0
  %860 = vmatprep.subr.mxu0 0.0
  %861 = vmatpush2.msra.mxu0 0.0
  %862 = vmatprep.subr.mxu0 0.0
  %863 = vmatpush2.msra.mxu0 0.0
  %864 = vmatprep.subr.mxu0 0.0
  %865 = vmatpush2.msra.mxu0 0.0
  %866 = vmatprep.subr.mxu0 0.0
  %867 = vmatpush2.msra.mxu0 0.0
  %868 = vmatprep.subr.mxu0 0.0
  %869 = vmatpush2.msra.mxu0 0.0
  %870 = vmatprep.subr.mxu0 0.0
  %871 = vmatpush2.msra.mxu0 0.0
  %872 = vmatprep.subr.mxu0 0.0
  %873 = vmatpush2.msra.mxu0 0.0
  %874 = vmatprep.subr.mxu0 0.0
  %875 = vmatpush2.msra.mxu0 0.0
  %876 = vmatprep.subr.mxu0 0.0
  %877 = vmatpush2.msra.mxu0 0.0
  %878 = vmatprep.subr.mxu0 0.0
  %879 = vmatpush2.msra.mxu0 0.0
  %880 = vmatprep.mubr.f32.mxu0 0.0
  %881 = vmatmul.mubr.f32.gmra.mxu0 %v814
  %v882 = vpop.f32.mrf.mxu0
  %v883 = vadd.f32 0.0, %v882
  %v884 = vpop.f32.mrf.mxu0
  %v885 = vadd.f32 0.0, %v884
  %886 = vdwg.mxu0
  %v887 = vadd.f32 %v809, %v883
  %v888 = vadd.f32 %v810, %v885
  %v889 = vtanh.pop %v887
  %v890 = vtanh.pop %v888
  %v891 = vmul.f32 %v889, %v55
  %v892 = vmul.f32 %v890, %v56
  %v893 = vadd.f32 %v891, %v57
  %v894 = vadd.f32 %v892, %v58
  %v895 = vmul.f32 %v893, %v798
  %v896 = vmul.f32 %v893, %v894
  %898 = vrot.lane.b32.xlu0 %v896, 64
  %v899 = vpop.permute.xlu0 %898
  %v901 = vadd.f32 %v895, %v899
  %v902 = vtanh.pop %v901
  %v903 = vmul.f32 %v894, %v902
  %v904 = vld [vmem:[%s4] sm:$0x1]
  %v906 = vlaneseq
  %v907 = vshrl.u32 %v906, 7
  %v908 = vsub.s32 0, %v907
  %v909 = vrot.slane %v904, %v908
  %910 = vrot.lane.b32.xlu0 %v909, 64
  %v911 = vpop.permute.xlu0 %910
  %v913 = vmul.f32 %v903, %v911
  %915 = vrot.lane.b32.xlu0 %v913, 64
  %v916 = vpop.permute.xlu0 %915
  %v918 = vsel %vm91, %v916, 0.0
  %919 = vadd.xlane.f32.xlu0 %v918
  %v920 = vpop.xlane.xlu0 %919
  %v921 = vld [vmem:[#allocation2] sm:$0x1]
  %v923 = vlaneseq
  %v924 = vshrl.u32 %v923, 7
  %v925 = vsub.s32 0, %v924
  %v926 = vrot.slane %v921, %v925
  %v928 = vadd.f32 %v920, %v926
  %vm929 = vcmask 7168
  %930 = vst.msk [vmem:[%s6] sm:$0xff] %vm929, %v928
  %932 = vrot.lane.b32.xlu0 %v903, 64
  %v933 = vpop.permute.xlu0 %932
  %935 = vst.msk [vmem:[%s7] sm:$0xff] %vm91, %v933
  %937 = vrot.lane.b32.xlu0 %v901, 64
  %v938 = vpop.permute.xlu0 %937
  %940 = vst.msk [vmem:[%s8] sm:$0xff] %vm91, %v938
  // Predicated region
  $region26: #{autoregressive_rnn_forward.1} parent=0 // pred_check
    _
  $region27: #{autoregressive_rnn_forward.1} parent=0 // pred_check_branch
    %942 = sbr.rel (0) target = $region29
  $region28: #{autoregressive_rnn_forward.1} parent=0 // pred_region
    _
  $region29: #{autoregressive_rnn_forward.1} parent=0 // pred_fallthru
    _
  // Predicated region
  $region30: #{autoregressive_rnn_forward.1} parent=0 // pred_check
    _
  $region31: #{autoregressive_rnn_forward.1} parent=0 // pred_check_branch
    %944 = sbr.rel (0) target = $region33
  $region32: #{autoregressive_rnn_forward.1} parent=0 // pred_region
    _
  $region33: #{autoregressive_rnn_forward.1} parent=0 // pred_fallthru
    _
  // Predicated region
  $region34: #{autoregressive_rnn_forward.1} parent=0 // pred_check
    _
  $region35: #{autoregressive_rnn_forward.1} parent=0 // pred_check_branch
    %946 = sbr.rel (0) target = $region37
  $region36: #{autoregressive_rnn_forward.1} parent=0 // pred_region
    _
  $region37: #{autoregressive_rnn_forward.1} parent=0 // pred_fallthru
    _
  // Predicated region
  $region38: #{autoregressive_rnn_forward.1} parent=0 // pred_check
    _
  $region39: #{autoregressive_rnn_forward.1} parent=0 // pred_check_branch
    %948 = sbr.rel (0) target = $region41
  $region40: #{autoregressive_rnn_forward.1} parent=0 // pred_region
    _
  $region41: #{autoregressive_rnn_forward.1} parent=0 // pred_fallthru
    _
  // Predicated region
  $region42: #{autoregressive_rnn_forward.1} parent=0 // pred_check
    _
  $region43: #{autoregressive_rnn_forward.1} parent=0 // pred_check_branch
    %950 = sbr.rel (0) target = $region45
  $region44: #{autoregressive_rnn_forward.1} parent=0 // pred_region
    _
  $region45: #{autoregressive_rnn_forward.1} parent=0 // pred_fallthru
    _
  // Predicated region
  $region46: #{autoregressive_rnn_forward.1} parent=0 // pred_check
    _
  $region47: #{autoregressive_rnn_forward.1} parent=0 // pred_check_branch
    %952 = sbr.rel (0) target = $region49
  $region48: #{autoregressive_rnn_forward.1} parent=0 // pred_region
    _
  $region49: #{autoregressive_rnn_forward.1} parent=0 // pred_fallthru
    _

</llo_original>
